<compile_context>
chip_gen: v5e
topology: v5e:2x2
jax: 0.10.0
libtpu: 0.0.40
codegen_flags: <defaults>
</compile_context>

<pallas_src>
import functools

import jax
import jax.numpy as jnp
from jax.experimental import pallas as pl
from jax.experimental.pallas import tpu as pltpu

_LANE = 128  # TPU vreg lane width


def _round_up(n, m):
    return (n + m - 1) // m * m


def _default_compute_dtype():
    """bf16 MXU operands pay off on v6e/v7x; keep f32 on v5e (no bf16 VPU path)."""
    try:
        kind = jax.devices()[0].device_kind.lower()
    except Exception:
        return jnp.float32
    if "v6" in kind or "v7" in kind:
        return jnp.bfloat16
    return jnp.float32


def _qnet_kernel(x_ref, w1_ref, b1_ref, w2_ref, b2_ref, o_ref):
    """Fused: relu(x @ W1 + b1) @ W2 + b2. Weights are pre-transposed (in, out)
    and feature-padded to 128 lanes; biases are f32 (1, padded_features)."""
    x = x_ref[...]
    w1 = w1_ref[...]
    w2 = w2_ref[...]
    # MXU matmul in operand dtype (bf16 on v6e/v7x, f32 on v5e), f32 accumulate.
    h = jnp.dot(x.astype(w1.dtype), w1, preferred_element_type=jnp.float32)
    # Bias + relu on the VPU in f32.
    h = jnp.maximum(h + b1_ref[...], 0.0)
    o = jnp.dot(h.astype(w2.dtype), w2, preferred_element_type=jnp.float32)
    # Lane-dense store: o_ref last dim is padded to a multiple of 128.
    o_ref[...] = (o + b2_ref[...]).astype(o_ref.dtype)


def prepare_qnet_params(w1, b1, w2, b2, *, compute_dtype=None):
    """One-time parameter prep (do NOT call per forward):
      - transpose PyTorch-layout (out, in) weights to (in, out),
      - zero-pad hidden/output feature dims to the 128-lane width,
      - cast matmul operands to the chip's preferred MXU dtype.
    Zero padding is exact: padded hidden columns are relu(0 + 0) = 0 and padded
    output columns are 0, so the sliced result matches the unpadded math."""
    if compute_dtype is None:
        compute_dtype = _default_compute_dtype()
    hidd_size, in_size = w1.shape
    out_size = w2.shape[0]
    hidd_p = _round_up(hidd_size, _LANE)
    out_p = _round_up(out_size, _LANE)

    w1_t = (
        jnp.zeros((in_size, hidd_p), compute_dtype)
        .at[:, :hidd_size]
        .set(w1.T.astype(compute_dtype))
    )
    b1_p = jnp.zeros((1, hidd_p), jnp.float32).at[:, :hidd_size].set(b1.astype(jnp.float32))
    w2_t = (
        jnp.zeros((hidd_p, out_p), compute_dtype)
        .at[:hidd_size, :out_size]
        .set(w2.T.astype(compute_dtype))
    )
    b2_p = jnp.zeros((1, out_p), jnp.float32).at[:, :out_size].set(b2.astype(jnp.float32))

    return {
        "w1": w1_t,   # (in, hidden_padded)
        "b1": b1_p,   # (1, hidden_padded) f32
        "w2": w2_t,   # (hidden_padded, out_padded)
        "b2": b2_p,   # (1, out_padded) f32
        "out_size": out_size,
    }


@functools.partial(jax.jit, static_argnames=("out_size",))
def _forward_jit(x, w1_t, b1_p, w2_t, b2_p, out_size):
    B = x.shape[0]
    out_p = w2_t.shape[1]
    # Single-block problem: no grid, no index_maps, whole arrays resident in VMEM.
    vmem = pl.BlockSpec(memory_space=pltpu.MemorySpace.VMEM)
    y_pad = pl.pallas_call(
        _qnet_kernel,
        out_shape=jax.ShapeDtypeStruct((B, out_p), x.dtype),
        in_specs=[vmem, vmem, vmem, vmem, vmem],
        out_specs=vmem,
    )(x, w1_t, b1_p, w2_t, b2_p)
    return y_pad[:, :out_size]


def linear_qnet_forward(x, params):
    """x: (B, in_size) f32. params: output of prepare_qnet_params."""
    return _forward_jit(
        x, params["w1"], params["b1"], params["w2"], params["b2"], params["out_size"]
    )


def _init_linear(key, out_features, in_features):
    # Deterministic init mimicking nn.Linear default (uniform +- 1/sqrt(in)).
    kw, kb = jax.random.split(key)
    bound = 1.0 / jnp.sqrt(in_features)
    w = jax.random.uniform(
        kw, (out_features, in_features), jnp.float32, minval=-bound, maxval=bound
    )
    b = jax.random.uniform(
        kb, (out_features,), jnp.float32, minval=-bound, maxval=bound
    )
    return w, b


if __name__ == "__main__":
    in_size, hidd_size, out_size = 16, 32, 4
    batch = 8

    key = jax.random.PRNGKey(0)
    kx, k1, k2 = jax.random.split(key, 3)

    x = jax.random.normal(kx, (batch, in_size), jnp.float32)
    w1, b1 = _init_linear(k1, hidd_size, in_size)
    w2, b2 = _init_linear(k2, out_size, hidd_size)

    # One-time parameter prep (transpose / pad / dtype) hoisted out of the call path.
    params = prepare_qnet_params(w1, b1, w2, b2)

    out = linear_qnet_forward(x, params)
    jax.block_until_ready(out)

    # Reference check (plain JAX, f32).
    h_ref = jnp.maximum(x @ w1.T + b1, 0.0)
    y_ref = h_ref @ w2.T + b2
    assert out.shape == (batch, out_size)
    if params["w1"].dtype == jnp.float32:
        atol = rtol = 1e-5
    else:  # bf16 MXU operands on v6e/v7x
        atol = rtol = 5e-2
    assert jnp.allclose(out, y_ref, atol=atol, rtol=rtol), (
        jnp.max(jnp.abs(out - y_ref))
    )

    print("KERNEL_OK")
</pallas_src>

<mosaic_0001>
module attributes {stable_mosaic.version = 11 : i64} {
  func.func @_qnet_kernel(%arg0: memref<8x16xf32, #tpu.memory_space<vmem>>, %arg1: memref<16x128xf32, #tpu.memory_space<vmem>>, %arg2: memref<1x128xf32, #tpu.memory_space<vmem>>, %arg3: memref<128x128xf32, #tpu.memory_space<vmem>>, %arg4: memref<1x128xf32, #tpu.memory_space<vmem>>, %arg5: memref<8x128xf32, #tpu.memory_space<vmem>>) attributes {dimension_semantics = [], scalar_prefetch = 0 : i64, scratch_operands = 0 : i64, tpu.core_type = #tpu.core_type<tc>} {
    %c0 = arith.constant 0 : index
    %c0_0 = arith.constant 0 : index
    %0 = vector.load %arg0[%c0, %c0_0] : memref<8x16xf32, #tpu.memory_space<vmem>>, vector<8x16xf32>
    %c0_1 = arith.constant 0 : index
    %c0_2 = arith.constant 0 : index
    %1 = vector.load %arg1[%c0_1, %c0_2] : memref<16x128xf32, #tpu.memory_space<vmem>>, vector<16x128xf32>
    %c0_3 = arith.constant 0 : index
    %c0_4 = arith.constant 0 : index
    %2 = vector.load %arg3[%c0_3, %c0_4] : memref<128x128xf32, #tpu.memory_space<vmem>>, vector<128x128xf32>
    %cst = arith.constant dense<0.000000e+00> : vector<8x128xf32>
    %3 = tpu.matmul %0, %1, %cst {dimension_numbers = #tpu.dot_dimension_numbers<[1], [0], [0], [1], [0, 0, 1, 1], [], []>} : vector<8x16xf32>, vector<16x128xf32>, vector<8x128xf32> -> vector<8x128xf32>
    %c0_5 = arith.constant 0 : index
    %c0_6 = arith.constant 0 : index
    %4 = vector.load %arg2[%c0_5, %c0_6] : memref<1x128xf32, #tpu.memory_space<vmem>>, vector<1x128xf32>
    %5 = vector.broadcast %4 : vector<1x128xf32> to vector<8x128xf32>
    %6 = arith.addf %3, %5 : vector<8x128xf32>
    %cst_7 = arith.constant 0.000000e+00 : f32
    %7 = vector.broadcast %cst_7 : f32 to vector<8x128xf32>
    %8 = arith.maximumf %6, %7 : vector<8x128xf32>
    %cst_8 = arith.constant dense<0.000000e+00> : vector<8x128xf32>
    %9 = tpu.matmul %8, %2, %cst_8 {dimension_numbers = #tpu.dot_dimension_numbers<[1], [0], [0], [1], [0, 0, 1, 1], [], []>} : vector<8x128xf32>, vector<128x128xf32>, vector<8x128xf32> -> vector<8x128xf32>
    %c0_9 = arith.constant 0 : index
    %c0_10 = arith.constant 0 : index
    %10 = vector.load %arg4[%c0_9, %c0_10] : memref<1x128xf32, #tpu.memory_space<vmem>>, vector<1x128xf32>
    %11 = vector.broadcast %10 : vector<1x128xf32> to vector<8x128xf32>
    %12 = arith.addf %9, %11 : vector<8x128xf32>
    %c0_11 = arith.constant 0 : index
    %c0_12 = arith.constant 0 : index
    %13 = vector.load %arg5[%c0_11, %c0_12] : memref<8x128xf32, #tpu.memory_space<vmem>>, vector<8x128xf32>
    tpu.vector_store %arg5[%c0_11, %c0_12], %12 {strides = array<i32>} : memref<8x128xf32, #tpu.memory_space<vmem>>, vector<8x128xf32>,
    return
  }
}

</mosaic_0001>

<llo_original>
// kernel: _forward_jit.1
$region0: #{_forward_jit.1}
  #allocation0 [shape = 'u32[]', space=smem, size = 0x4, offset = 0x4, fixed_abs, tag = 'smem constant byte address 0x4 - core index']
  #allocation1 [shape = 'u32[72,128]{1,0:T(1,128)}', space=vmem, size = 0x9000, scoped, tag = 'internal scratch']
  %s0 = inlined_call_operand.hbm [shape: f32[8,16], index: 0, kind: input, shape index: {}]
  %s1 = inlined_call_operand.hbm [shape: f32[16,128], index: 1, kind: input, shape index: {}]
  %s2 = inlined_call_operand.vmem [shape: f32[1,128], index: 2, kind: input, shape index: {}]
  %s3 = inlined_call_operand.hbm [shape: f32[128,128], index: 3, kind: input, shape index: {}]
  %s4 = inlined_call_operand.vmem [shape: f32[1,128], index: 4, kind: input, shape index: {}]
  %s5 = inlined_call_operand.vmem [shape: f32[8,128], index: 5, kind: output, shape index: {}]
  %s6 = sld [smem:[#allocation0]]
  $region42: #{_forward_jit.1} parent=0
    _
  %s8 = ssub.s32 1, %s6
  %s9 = scalar_select 0, %s8, %s6
  $region1: #{_forward_jit.1} parent=0
    #allocation2 [shape = 'u8[4096]{0}', space=vmem, size = 0x1000, scoped, tag = 'input window, operand 0, single buffered']
    #allocation3 [shape = 's32[1]{0}', space=sflag, size = 0x4, scoped, tag = 'scoped memory for _forward_jit.1']
    #allocation4 [shape = 'u8[8192]{0}', space=vmem, size = 0x2000, scoped, tag = 'input window, operand 1, single buffered']
    #allocation5 [shape = 's32[1]{0}', space=sflag, size = 0x4, scoped, tag = 'scoped memory for _forward_jit.1']
    #allocation6 [shape = 'u8[65536]{0}', space=vmem, size = 0x10000, scoped, tag = 'input window, operand 3, single buffered']
    %10 = vsyncpa [#allocation3], 0
    %11 = vsyncpa [#allocation5], 0
    // Predicated region
    $region2: #{_forward_jit.1} parent=1 // pred_check
      _
    $region3: #{_forward_jit.1} parent=1 // pred_check_branch
      %13 = sbr.rel (0) target = $region5
    $region4: #{_forward_jit.1} parent=1 // pred_region
      %15 = vsyncadd [#allocation3], 0
      %s17 = sshll.u32 %s0, 4
      %s18 = int_to_ptr.hbm [resolvable:$true] %s17
      %s19 = sshll.u32 [#allocation2], 4
      %s20 = int_to_ptr.vmem [resolvable:$true] %s19
      %22 = dma.hbm_to_vmem [thread:$0]  %s18, 128, %s20, [#allocation3]
    $region5: #{_forward_jit.1} parent=1 // pred_fallthru
      _
    // Predicated region
    $region6: #{_forward_jit.1} parent=1 // pred_check
      _
    $region7: #{_forward_jit.1} parent=1 // pred_check_branch
      %24 = sbr.rel (0) target = $region9
    $region8: #{_forward_jit.1} parent=1 // pred_region
      %26 = vsyncadd [#allocation5], 0
      %s27 = sshll.u32 %s1, 4
      %s28 = int_to_ptr.hbm [resolvable:$true] %s27
      %s29 = sshll.u32 [#allocation4], 4
      %s30 = int_to_ptr.vmem [resolvable:$true] %s29
      %35 = dma.hbm_to_vmem [thread:$0]  %s28, 256, %s30, [#allocation5], 128, 128, 8
    $region9: #{_forward_jit.1} parent=1 // pred_fallthru
      _
    // Predicated region
    $region10: #{_forward_jit.1} parent=1 // pred_check
      _
    $region11: #{_forward_jit.1} parent=1 // pred_check_branch
      %37 = sbr.rel (0) target = $region13
    $region12: #{_forward_jit.1} parent=1 // pred_region
      _
    $region13: #{_forward_jit.1} parent=1 // pred_fallthru
      _
    // Predicated region
    $region14: #{_forward_jit.1} parent=1 // pred_check
      _
    $region15: #{_forward_jit.1} parent=1 // pred_check_branch
      %39 = sbr.rel (0) target = $region17
    $region16: #{_forward_jit.1} parent=1 // pred_region
      %41 = vsyncadd [#allocation5], 0
      %s42 = sshll.u32 %s3, 4
      %s43 = int_to_ptr.hbm [resolvable:$true] %s42
      %s44 = sshll.u32 [#allocation6], 4
      %s45 = int_to_ptr.vmem [resolvable:$true] %s44
      %50 = dma.hbm_to_vmem [thread:$0]  %s43, 2048, %s45, [#allocation5], 128, 128, 8
    $region17: #{_forward_jit.1} parent=1 // pred_fallthru
      _
    // Predicated region
    $region18: #{_forward_jit.1} parent=1 // pred_check
      _
    $region19: #{_forward_jit.1} parent=1 // pred_check_branch
      %52 = sbr.rel (0) target = $region21
    $region20: #{_forward_jit.1} parent=1 // pred_region
      _
    $region21: #{_forward_jit.1} parent=1 // pred_fallthru
      _
    // Predicated region
    $region22: #{_forward_jit.1} parent=1 // pred_check
      _
    $region23: #{_forward_jit.1} parent=1 // pred_check_branch
      %54 = sbr.rel (0) target = $region25
    $region24: #{_forward_jit.1} parent=1 // pred_region
      %56 = dma.done [#allocation3], 128
    $region25: #{_forward_jit.1} parent=1 // pred_fallthru
      _
    // Predicated region
    $region26: #{_forward_jit.1} parent=1 // pred_check
      _
    $region27: #{_forward_jit.1} parent=1 // pred_check_branch
      %58 = sbr.rel (0) target = $region29
    $region28: #{_forward_jit.1} parent=1 // pred_region
      %60 = dma.done [#allocation5], 256
    $region29: #{_forward_jit.1} parent=1 // pred_fallthru
      _
    // Predicated region
    $region30: #{_forward_jit.1} parent=1 // pred_check
      _
    $region31: #{_forward_jit.1} parent=1 // pred_check_branch
      %62 = sbr.rel (0) target = $region33
    $region32: #{_forward_jit.1} parent=1 // pred_region
      %64 = dma.done [#allocation5], 2048
    $region33: #{_forward_jit.1} parent=1 // pred_fallthru
      _
    %v65 = vld [vmem:[#allocation2] sm:$0xff]
    %v66 = vld [vmem:[#allocation4] sm:$0xff]
    %v67 = vld [vmem:[#allocation4 + $0x8] sm:$0xff]
    %v68 = vld [vmem:[#allocation6] sm:$0xff]
    %v69 = vld [vmem:[#allocation6 + $0x8] sm:$0xff]
    %v70 = vld [vmem:[#allocation6 + $0x10] sm:$0xff]
    %v71 = vld [vmem:[#allocation6 + $0x18] sm:$0xff]
    %v72 = vld [vmem:[#allocation6 + $0x20] sm:$0xff]
    %v73 = vld [vmem:[#allocation6 + $0x28] sm:$0xff]
    %v74 = vld [vmem:[#allocation6 + $0x30] sm:$0xff]
    %v75 = vld [vmem:[#allocation6 + $0x38] sm:$0xff]
    %v76 = vld [vmem:[#allocation6 + $0x40] sm:$0xff]
    %v77 = vld [vmem:[#allocation6 + $0x48] sm:$0xff]
    %v78 = vld [vmem:[#allocation6 + $0x50] sm:$0xff]
    %v79 = vld [vmem:[#allocation6 + $0x58] sm:$0xff]
    %v80 = vld [vmem:[#allocation6 + $0x60] sm:$0xff]
    %v81 = vld [vmem:[#allocation6 + $0x68] sm:$0xff]
    %v82 = vld [vmem:[#allocation6 + $0x70] sm:$0xff]
    %v83 = vld [vmem:[#allocation6 + $0x78] sm:$0xff]
    %v84 = vld [vmem:[%s2] sm:$0x1]
    %v86 = vperm.slane %v84, 0
    %vm88 = vcmask 130048
    %v90 = vsel %vm88, %v65, 0
    %92 = vmatpush.msra.mxu0 0.0
    %93 = vmatpush.msra.mxu0 0.0
    %94 = vmatpush.msra.mxu0 0.0
    %95 = vmatpush.msra.mxu0 0.0
    %96 = vmatpush.msra.mxu0 0.0
    %97 = vmatpush.msra.mxu0 0.0
    %98 = vmatpush.msra.mxu0 0.0
    %99 = vmatpush.msra.mxu0 0.0
    %100 = vmatpush.msra.mxu0 0.0
    %101 = vmatpush.msra.mxu0 0.0
    %102 = vmatpush.msra.mxu0 0.0
    %103 = vmatpush.msra.mxu0 0.0
    %104 = vmatpush.msra.mxu0 0.0
    %105 = vmatpush.msra.mxu0 0.0
    %106 = vmatpush.msra.mxu0 %v67
    %107 = vmatpush.msra.mxu0 %v66
    %108 = vmatmul.f32.gmra.mxu0 %v90
    %v109 = vpop.f32.mrf.mxu0
    %v110 = vadd.f32 %v86, %v109
    %111 = vdwg.mxu0
    %v112 = vmax.f32 %v110, 0.0
    %v113 = vld [vmem:[%s4] sm:$0x1]
    %v115 = vperm.slane %v113, 0
    %117 = vmatpush.msra.mxu0 %v83
    %118 = vmatpush.msra.mxu0 %v82
    %119 = vmatpush.msra.mxu0 %v81
    %120 = vmatpush.msra.mxu0 %v80
    %121 = vmatpush.msra.mxu0 %v79
    %122 = vmatpush.msra.mxu0 %v78
    %123 = vmatpush.msra.mxu0 %v77
    %124 = vmatpush.msra.mxu0 %v76
    %125 = vmatpush.msra.mxu0 %v75
    %126 = vmatpush.msra.mxu0 %v74
    %127 = vmatpush.msra.mxu0 %v73
    %128 = vmatpush.msra.mxu0 %v72
    %129 = vmatpush.msra.mxu0 %v71
    %130 = vmatpush.msra.mxu0 %v70
    %131 = vmatpush.msra.mxu0 %v69
    %132 = vmatpush.msra.mxu0 %v68
    %133 = vmatmul.f32.gmra.mxu0 %v112
    %v134 = vpop.f32.mrf.mxu0
    %v135 = vadd.f32 %v115, %v134
    %136 = vdwg.mxu0
    %137 = vst [vmem:[%s5] sm:$0xff] %v135
    // Predicated region
    $region34: #{_forward_jit.1} parent=1 // pred_check
      _
    $region35: #{_forward_jit.1} parent=1 // pred_check_branch
      %139 = sbr.rel (0) target = $region37
    $region36: #{_forward_jit.1} parent=1 // pred_region
      _
    $region37: #{_forward_jit.1} parent=1 // pred_fallthru
      _
    // Predicated region
    $region38: #{_forward_jit.1} parent=1 // pred_check
      _
    $region39: #{_forward_jit.1} parent=1 // pred_check_branch
      %141 = sbr.rel (0) target = $region41
    $region40: #{_forward_jit.1} parent=1 // pred_region
      _
    $region41: #{_forward_jit.1} parent=1 // pred_fallthru
      _
    %142 = vsyncpa [#allocation3], 1
    %143 = vsyncpa [#allocation5], 1

</llo_original>
